<compile_context>
chip_gen: v5e
topology: v5e:2x2
jax: 0.10.0
libtpu: 0.0.40
codegen_flags: <defaults>
</compile_context>

<pallas_src>
import functools

import jax
import jax.numpy as jnp
from jax import lax
from jax.experimental import pallas as pl
from jax.experimental.pallas import tpu as pltpu

_LANES = 128
_EPS = 1e-5


def _packed_layernorm_kernel(x_ref, w_ref, b_ref, m_ref, o_ref):
    """Lane-dense LayerNorm.

    x_ref: (TM, 128) tile; each row packs `pack = 128 // C` independent
           LayerNorm rows, one per contiguous C-lane segment.
    w_ref/b_ref: (1, 128) params tiled `pack` times (stride-0 sublane bcast).
    m_ref: (128, 128) bf16 block-diagonal matrix with 1/C in each CxC block:
           x @ m = per-segment mean broadcast back to every lane of that
           segment, computed on the otherwise-idle MXU (frees VPU/XLU).
    """
    x = x_ref[...].astype(jnp.float32)
    m = m_ref[...]

    def seg_mean(v):
        # bf16 hi/lo split so the bf16 MXU reduction stays ~f32 accurate
        # (entries of m are exact powers of two in bf16; accumulation is f32).
        hi = v.astype(jnp.bfloat16)
        lo = (v - hi.astype(jnp.float32)).astype(jnp.bfloat16)
        return (jnp.dot(hi, m, preferred_element_type=jnp.float32)
                + jnp.dot(lo, m, preferred_element_type=jnp.float32))

    mu = seg_mean(x)
    xc = x - mu
    var = seg_mean(xc * xc)              # population variance (unbiased=False)
    inv = lax.rsqrt(var + _EPS)          # EUP rsqrt: separate bundle slot, ~free
    w = w_ref[...].astype(jnp.float32)
    b = b_ref[...].astype(jnp.float32)
    o_ref[...] = (xc * inv * w + b).astype(o_ref.dtype)


def _rowwise_layernorm_kernel(x_ref, w_ref, b_ref, o_ref):
    """Generic fallback for C that does not evenly divide 128 lanes."""
    x = x_ref[...].astype(jnp.float32)
    mu = jnp.mean(x, axis=-1, keepdims=True)
    xc = x - mu
    var = jnp.mean(xc * xc, axis=-1, keepdims=True)
    inv = lax.rsqrt(var + _EPS)
    y = xc * inv * w_ref[...].astype(jnp.float32) + b_ref[...].astype(jnp.float32)
    o_ref[...] = y.astype(o_ref.dtype)


def _pick_block_rows(nrows, row_bytes, target_bytes=2 * 1024 * 1024):
    """Pick the second-minor tile size: ~2 MiB tiles, but keep >= 2 grid steps
    (v7x has 2 TensorCores) and a multiple of 8 sublanes."""
    if nrows < 16:
        return nrows                       # single full-extent block (always legal)
    blk = max(1, target_bytes // row_bytes)
    blk = min(blk, (nrows + 1) // 2)       # at least 2 grid steps for megacore
    blk = max(8, (blk // 8) * 8)           # multiple of 8 sublanes
    return blk


@functools.partial(jax.jit, static_argnames=("vmem_limit_bytes",))
def withbias_layernorm(x, weight, bias, vmem_limit_bytes=32 * 1024 * 1024):
    """WithBias_LayerNorm forward: LayerNorm over the last dim of x.

    x: (..., C); weight, bias: (C,). Matches torch.var(unbiased=False), eps=1e-5.
    """
    orig_shape = x.shape
    C = orig_shape[-1]
    rows = 1
    for d in orig_shape[:-1]:
        rows *= d

    compiler_params = pltpu.CompilerParams(
        dimension_semantics=("parallel",),
        vmem_limit_bytes=vmem_limit_bytes,
    )

    pack = _LANES // C if (C <= _LANES and _LANES % C == 0) else 1
    use_packed = pack > 1 and rows % pack == 0

    if use_packed:
        packed_rows = rows // pack
        x2 = x.reshape(packed_rows, _LANES)                  # free contiguous reshape
        w2 = jnp.tile(weight.reshape(1, C), (1, pack))       # (1, 128)
        b2 = jnp.tile(bias.reshape(1, C), (1, pack))         # (1, 128)
        # Block-diagonal segmented-mean matrix: 1/C inside each CxC block.
        seg = jnp.repeat(jnp.arange(pack, dtype=jnp.int32), C)          # (128,)
        m = ((seg[:, None] == seg[None, :]).astype(jnp.float32) / C)    # (128,128)
        m = m.astype(jnp.bfloat16)   # 1/C is a power of two here -> exact in bf16

        blk = _pick_block_rows(packed_rows, _LANES * 4)
        grid = pl.cdiv(packed_rows, blk)                     # ragged last tile OK

        out2 = pl.pallas_call(
            _packed_layernorm_kernel,
            out_shape=jax.ShapeDtypeStruct((packed_rows, _LANES), x.dtype),
            grid_spec=pltpu.PrefetchScalarGridSpec(
                num_scalar_prefetch=0,
                grid=(grid,),
                in_specs=[
                    pl.BlockSpec((blk, _LANES), lambda i: (i, 0)),
                    pl.BlockSpec((1, _LANES), lambda i: (0, 0)),     # constant block:
                    pl.BlockSpec((1, _LANES), lambda i: (0, 0)),     #   no re-DMA
                    pl.BlockSpec((_LANES, _LANES), lambda i: (0, 0)),
                ],
                out_specs=pl.BlockSpec((blk, _LANES), lambda i: (i, 0)),
            ),
            compiler_params=compiler_params,
        )(x2, w2, b2, m)
        return out2.reshape(orig_shape)

    # Fallback path (C does not divide 128 lanes): still uses large tiles + cdiv grid.
    x2 = x.reshape(rows, C)
    w2 = weight.reshape(1, C)
    b2 = bias.reshape(1, C)
    blk = _pick_block_rows(rows, C * 4)
    grid = pl.cdiv(rows, blk)
    out2 = pl.pallas_call(
        _rowwise_layernorm_kernel,
        out_shape=jax.ShapeDtypeStruct((rows, C), x.dtype),
        grid_spec=pltpu.PrefetchScalarGridSpec(
            num_scalar_prefetch=0,
            grid=(grid,),
            in_specs=[
                pl.BlockSpec((blk, C), lambda i: (i, 0)),
                pl.BlockSpec((1, C), lambda i: (0, 0)),
                pl.BlockSpec((1, C), lambda i: (0, 0)),
            ],
            out_specs=pl.BlockSpec((blk, C), lambda i: (i, 0)),
        ),
        compiler_params=compiler_params,
    )(x2, w2, b2)
    return out2.reshape(orig_shape)


def _reference(x, weight, bias):
    x32 = x.astype(jnp.float32)
    mu = jnp.mean(x32, axis=-1, keepdims=True)
    var = jnp.mean((x32 - mu) ** 2, axis=-1, keepdims=True)
    return ((x32 - mu) / jnp.sqrt(var + _EPS) * weight + bias).astype(x.dtype)


if __name__ == "__main__":
    # Shapes consistent with the module's use in the transformer block:
    # B=2, spatial 8x8 -> N=64 tokens, C=32 channels (normalized_shape=32).
    B, N, C = 2, 64, 32
    key = jax.random.PRNGKey(0)
    kx, kw, kb = jax.random.split(key, 3)
    x = jax.random.normal(kx, (B, N, C), dtype=jnp.float32)

    # nn.Parameter(torch.ones/zeros) init, deterministically perturbed so the
    # scale/shift path is actually exercised.
    weight = jnp.ones((C,), jnp.float32) + 0.1 * jax.random.normal(kw, (C,), jnp.float32)
    bias = jnp.zeros((C,), jnp.float32) + 0.1 * jax.random.normal(kb, (C,), jnp.float32)

    out = jax.block_until_ready(withbias_layernorm(x, weight, bias))
    ref = _reference(x, weight, bias)
    assert out.shape == (B, N, C)
    max_err = jnp.max(jnp.abs(out - ref))
    assert jnp.allclose(out, ref, atol=1e-4, rtol=1e-4), f"mismatch vs reference (max abs err {max_err})"
    print("KERNEL_OK")
</pallas_src>

<mosaic_0001>
module attributes {stable_mosaic.version = 11 : i64} {
  func.func @_packed_layernorm_kernel(%arg0: i32, %arg1: memref<16x128xf32, #tpu.memory_space<vmem>>, %arg2: memref<1x128xf32, #tpu.memory_space<vmem>>, %arg3: memref<1x128xf32, #tpu.memory_space<vmem>>, %arg4: memref<128x128xbf16, #tpu.memory_space<vmem>>, %arg5: memref<16x128xf32, #tpu.memory_space<vmem>>) attributes {dimension_semantics = [#tpu.dimension_semantics<parallel>], iteration_bounds = array<i64: 2>, scalar_prefetch = 0 : i64, scratch_operands = 0 : i64, tpu.core_type = #tpu.core_type<tc>, window_params = [{transform_indices = @transform_0, window_bounds = array<i64: 16, 128>}, {pipeline_mode = #tpu.pipeline_mode<synchronous>, transform_indices = @transform_1, window_bounds = array<i64: 1, 128>}, {pipeline_mode = #tpu.pipeline_mode<synchronous>, transform_indices = @transform_2, window_bounds = array<i64: 1, 128>}, {pipeline_mode = #tpu.pipeline_mode<synchronous>, transform_indices = @transform_3, window_bounds = array<i64: 128, 128>}, {transform_indices = @transform_4, window_bounds = array<i64: 16, 128>}]} {
    %c0 = arith.constant 0 : index
    %c0_0 = arith.constant 0 : index
    %0 = vector.load %arg1[%c0, %c0_0] : memref<16x128xf32, #tpu.memory_space<vmem>>, vector<16x128xf32>
    %c0_1 = arith.constant 0 : index
    %c0_2 = arith.constant 0 : index
    %1 = vector.load %arg4[%c0_1, %c0_2] : memref<128x128xbf16, #tpu.memory_space<vmem>>, vector<128x128xbf16>
    %2 = arith.truncf %0 : vector<16x128xf32> to vector<16x128xbf16>
    %3 = arith.extf %2 : vector<16x128xbf16> to vector<16x128xf32>
    %4 = arith.subf %0, %3 : vector<16x128xf32>
    %5 = arith.truncf %4 : vector<16x128xf32> to vector<16x128xbf16>
    %cst = arith.constant dense<0.000000e+00> : vector<16x128xf32>
    %6 = tpu.matmul %2, %1, %cst {dimension_numbers = #tpu.dot_dimension_numbers<[1], [0], [0], [1], [0, 0, 1, 1], [], []>} : vector<16x128xbf16>, vector<128x128xbf16>, vector<16x128xf32> -> vector<16x128xf32>
    %cst_3 = arith.constant dense<0.000000e+00> : vector<16x128xf32>
    %7 = tpu.matmul %5, %1, %cst_3 {dimension_numbers = #tpu.dot_dimension_numbers<[1], [0], [0], [1], [0, 0, 1, 1], [], []>} : vector<16x128xbf16>, vector<128x128xbf16>, vector<16x128xf32> -> vector<16x128xf32>
    %8 = arith.addf %6, %7 : vector<16x128xf32>
    %9 = arith.subf %0, %8 : vector<16x128xf32>
    %10 = arith.mulf %9, %9 : vector<16x128xf32>
    %11 = arith.truncf %10 : vector<16x128xf32> to vector<16x128xbf16>
    %12 = arith.extf %11 : vector<16x128xbf16> to vector<16x128xf32>
    %13 = arith.subf %10, %12 : vector<16x128xf32>
    %14 = arith.truncf %13 : vector<16x128xf32> to vector<16x128xbf16>
    %cst_4 = arith.constant dense<0.000000e+00> : vector<16x128xf32>
    %15 = tpu.matmul %11, %1, %cst_4 {dimension_numbers = #tpu.dot_dimension_numbers<[1], [0], [0], [1], [0, 0, 1, 1], [], []>} : vector<16x128xbf16>, vector<128x128xbf16>, vector<16x128xf32> -> vector<16x128xf32>
    %cst_5 = arith.constant dense<0.000000e+00> : vector<16x128xf32>
    %16 = tpu.matmul %14, %1, %cst_5 {dimension_numbers = #tpu.dot_dimension_numbers<[1], [0], [0], [1], [0, 0, 1, 1], [], []>} : vector<16x128xbf16>, vector<128x128xbf16>, vector<16x128xf32> -> vector<16x128xf32>
    %17 = arith.addf %15, %16 : vector<16x128xf32>
    %cst_6 = arith.constant 9.99999974E-6 : f32
    %18 = vector.broadcast %cst_6 : f32 to vector<16x128xf32>
    %19 = arith.addf %17, %18 : vector<16x128xf32>
    %20 = math.rsqrt %19 : vector<16x128xf32>
    %c0_7 = arith.constant 0 : index
    %c0_8 = arith.constant 0 : index
    %21 = vector.load %arg2[%c0_7, %c0_8] : memref<1x128xf32, #tpu.memory_space<vmem>>, vector<1x128xf32>
    %c0_9 = arith.constant 0 : index
    %c0_10 = arith.constant 0 : index
    %22 = vector.load %arg3[%c0_9, %c0_10] : memref<1x128xf32, #tpu.memory_space<vmem>>, vector<1x128xf32>
    %23 = arith.mulf %9, %20 : vector<16x128xf32>
    %24 = vector.broadcast %21 : vector<1x128xf32> to vector<16x128xf32>
    %25 = arith.mulf %23, %24 : vector<16x128xf32>
    %26 = vector.broadcast %22 : vector<1x128xf32> to vector<16x128xf32>
    %27 = arith.addf %25, %26 : vector<16x128xf32>
    %c0_11 = arith.constant 0 : index
    %c0_12 = arith.constant 0 : index
    %28 = vector.load %arg5[%c0_11, %c0_12] : memref<16x128xf32, #tpu.memory_space<vmem>>, vector<16x128xf32>
    tpu.vector_store %arg5[%c0_11, %c0_12], %27 {strides = array<i32>} : memref<16x128xf32, #tpu.memory_space<vmem>>, vector<16x128xf32>,
    return
  }
  func.func @transform_0(%arg0: i32) -> (i32, i32) {
    %c0_i32 = arith.constant 0 : i32
    %c0_i32_0 = arith.constant 0 : i32
    return %arg0, %c0_i32 : i32, i32
  }
  func.func @transform_1(%arg0: i32) -> (i32, i32) {
    %c0_i32 = arith.constant 0 : i32
    %c0_i32_0 = arith.constant 0 : i32
    %c0_i32_1 = arith.constant 0 : i32
    return %c0_i32, %c0_i32_0 : i32, i32
  }
  func.func @transform_2(%arg0: i32) -> (i32, i32) {
    %c0_i32 = arith.constant 0 : i32
    %c0_i32_0 = arith.constant 0 : i32
    %c0_i32_1 = arith.constant 0 : i32
    return %c0_i32, %c0_i32_0 : i32, i32
  }
  func.func @transform_3(%arg0: i32) -> (i32, i32) {
    %c0_i32 = arith.constant 0 : i32
    %c0_i32_0 = arith.constant 0 : i32
    %c0_i32_1 = arith.constant 0 : i32
    return %c0_i32, %c0_i32_0 : i32, i32
  }
  func.func @transform_4(%arg0: i32) -> (i32, i32) {
    %c0_i32 = arith.constant 0 : i32
    %c0_i32_0 = arith.constant 0 : i32
    return %arg0, %c0_i32 : i32, i32
  }
}

</mosaic_0001>

<llo_original>
// kernel: eq.8
$region0: #{eq.8}
  %s0 = inlined_call_operand.vmem [shape: s32[4,32], index: 0, kind: input, shape index: {}]
  %s1 = inlined_call_operand.vmem [shape: s32[128], index: 1, kind: output, shape index: {}]
  $region1: #{eq.8} parent=0
    #allocation0 [shape = 'u8[4096]{0}', space=vmem, size = 0x1000, scoped, tag = 'scoped mem for output reshape']
    #allocation1 [shape = 'u8[4096]{0}', space=vmem, size = 0x1000, scoped, tag = 'scoped mem for input reshape']
    %s3 = ssub.s32 16, 1
    %v4 = vld [vmem:[%s0] sm:%s3]
    %5 = vst [vmem:[#allocation1] sm:%s3] %v4
    %v6 = vld [vmem:[#allocation1] sm:$0x1]
    %vm7 = vcmask 261120
    %8 = vst.msk [vmem:[#allocation0] sm:$0x1] %vm7, %v6
    %s9 = scalar_lea.vmem [#allocation1], 3
    %v10 = vld [vmem:[%s9] sm:$0x1]
    %11 = vrot.lane.b32.xlu0 %v10, 96
    %v12 = vpop.permute.xlu0 %11
    %vm13 = vcmask 1048320
    %14 = vst.msk [vmem:[#allocation0] sm:$0x1] %vm13, %v12
    %s15 = scalar_lea.vmem [#allocation1], 2
    %v16 = vld [vmem:[%s15] sm:$0x1]
    %17 = vrot.lane.b32.xlu0 %v16, 64
    %v18 = vpop.permute.xlu0 %17
    %vm19 = vcmask 785920
    %20 = vst.msk [vmem:[#allocation0] sm:$0x1] %vm19, %v18
    %s21 = scalar_lea.vmem [#allocation1], 1
    %v22 = vld [vmem:[%s21] sm:$0x1]
    %23 = vrot.lane.b32.xlu0 %v22, 32
    %v24 = vpop.permute.xlu0 %23
    %vm25 = vcmask 523520
    %26 = vst.msk [vmem:[#allocation0] sm:$0x1] %vm25, %v24
    %s28 = ssub.s32 2, 1
    %v29 = vld [vmem:[#allocation0] sm:%s28]
    %s31 = ssub.s32 2, 1
    %32 = vst [vmem:[%s1] sm:%s31] %v29

// kernel: withbias_layernorm.1
$region0: #{withbias_layernorm.1}
  #allocation0 [shape = 'u32[]', space=smem, size = 0x4, offset = 0x4, fixed_abs, tag = 'smem constant byte address 0x4 - core index']
  #allocation1 [shape = 'u32[72,128]{1,0:T(1,128)}', space=vmem, size = 0x9000, scoped, tag = 'internal scratch']
  %s0 = inlined_call_operand.vmem [shape: f32[32,128], index: 0, kind: input, shape index: {}]
  %s1 = inlined_call_operand.vmem [shape: f32[1,128], index: 1, kind: input, shape index: {}]
  %s2 = inlined_call_operand.vmem [shape: f32[1,128], index: 2, kind: input, shape index: {}]
  %s3 = inlined_call_operand.vmem [shape: bf16[128,128], index: 3, kind: input, shape index: {}]
  %s4 = inlined_call_operand.vmem [shape: f32[32,128], index: 4, kind: output, shape index: {}]
  %s5 = sld [smem:[#allocation0]]
  $region49: #{withbias_layernorm.1} parent=0
    _
  %s7 = ssub.s32 1, %s5
  %s8 = scalar_select 0, %s7, %s5
  loop: start=0, step=1, limit=4
  $region2: #{withbias_layernorm.1} parent=0 // loop_pre_header
    _
  $region3: #{withbias_layernorm.1} parent=0 // loop_header
    %s10 = sphi 0, %s14
    %p11 = scmp.ge.s32.totalorder %s10, 4
    %s20 = sphi 0, %s22
    %s23 = sphi 0, %s20
    %s24 = sphi 0, %s23
    %s40 = sphi 0, %s24
    %s44 = sphi 0, %s44
    %s46 = sphi 0, %s44
    %s47 = sphi 0, %s46
    %s61 = sphi 0, %s47
    %s65 = sphi 0, %s65
    %s67 = sphi 0, %s65
    %s68 = sphi 0, %s67
    %s82 = sphi 0, %s68
    %s86 = sphi 0, %s86
    %s88 = sphi 0, %s86
    %s89 = sphi 0, %s88
    %s103 = sphi 0, %s89
    %s109 = sphi 0, %s111
    %s112 = sphi 0, %s109
    %s113 = sphi 0, %s112
    %s129 = sphi 0, %s113
  $region4: #{withbias_layernorm.1} parent=0 // loop_header_branch
    %13 = sbr.rel (%p11) target = $region8
  $region5: #{withbias_layernorm.1} parent=0 // loop_body
    %s15 = ssub.s32 %s10, 1
    %s16 = ssub.s32 %s10, 2
    %s17 = sadd.s32 %s10, 1
    %s18 = ssub.s32 %s10, %s17
    %p19 = scmp.eq.s32.totalorder %s18, 0
    %s21 = sadd.s32 %s20, 1
    %s22 = scalar_select %p19, %s20, %s21
    %p25 = pneg %p19
    %p26 = scmp.eq.s32.totalorder %s10, 1
    %p27 = por %p25, %p26
    %p28 = scmp.ne.s32.totalorder %s20, %s23
    %p29 = scmp.eq.s32.totalorder %s10, 0
    %p30 = por %p28, %p29
    %p31 = scmp.ne.s32.totalorder %s20, %s23
    %p32 = scmp.eq.s32.totalorder %s15, 1
    %p33 = por %p31, %p32
    %p34 = scmp.ne.s32.totalorder %s23, %s24
    %p35 = scmp.eq.s32.totalorder %s15, 0
    %p36 = por %p34, %p35
    %p37 = scmp.ne.s32.totalorder %s23, %s24
    %p38 = scmp.eq.s32.totalorder %s16, 1
    %p39 = por %p37, %p38
    %p41 = scmp.ne.s32.totalorder %s24, %s40
    %p42 = scmp.eq.s32.totalorder %s16, 0
    %p43 = por %p41, %p42
    %s45 = sadd.s32 %s44, 1
    %p48 = scmp.eq.s32.totalorder %s10, 1
    %p49 = scmp.ne.s32.totalorder %s44, %s46
    %p50 = scmp.eq.s32.totalorder %s10, 0
    %p51 = por %p49, %p50
    %p52 = scmp.ne.s32.totalorder %s44, %s46
    %p53 = scmp.eq.s32.totalorder %s15, 1
    %p54 = por %p52, %p53
    %p55 = scmp.ne.s32.totalorder %s46, %s47
    %p56 = scmp.eq.s32.totalorder %s15, 0
    %p57 = por %p55, %p56
    %p58 = scmp.ne.s32.totalorder %s46, %s47
    %p59 = scmp.eq.s32.totalorder %s16, 1
    %p60 = por %p58, %p59
    %p62 = scmp.ne.s32.totalorder %s47, %s61
    %p63 = scmp.eq.s32.totalorder %s16, 0
    %p64 = por %p62, %p63
    %s66 = sadd.s32 %s65, 1
    %p69 = scmp.eq.s32.totalorder %s10, 1
    %p70 = scmp.ne.s32.totalorder %s65, %s67
    %p71 = scmp.eq.s32.totalorder %s10, 0
    %p72 = por %p70, %p71
    %p73 = scmp.ne.s32.totalorder %s65, %s67
    %p74 = scmp.eq.s32.totalorder %s15, 1
    %p75 = por %p73, %p74
    %p76 = scmp.ne.s32.totalorder %s67, %s68
    %p77 = scmp.eq.s32.totalorder %s15, 0
    %p78 = por %p76, %p77
    %p79 = scmp.ne.s32.totalorder %s67, %s68
    %p80 = scmp.eq.s32.totalorder %s16, 1
    %p81 = por %p79, %p80
    %p83 = scmp.ne.s32.totalorder %s68, %s82
    %p84 = scmp.eq.s32.totalorder %s16, 0
    %p85 = por %p83, %p84
    %s87 = sadd.s32 %s86, 1
    %p90 = scmp.eq.s32.totalorder %s10, 1
    %p91 = scmp.ne.s32.totalorder %s86, %s88
    %p92 = scmp.eq.s32.totalorder %s10, 0
    %p93 = por %p91, %p92
    %p94 = scmp.ne.s32.totalorder %s86, %s88
    %p95 = scmp.eq.s32.totalorder %s15, 1
    %p96 = por %p94, %p95
    %p97 = scmp.ne.s32.totalorder %s88, %s89
    %p98 = scmp.eq.s32.totalorder %s15, 0
    %p99 = por %p97, %p98
    %p100 = scmp.ne.s32.totalorder %s88, %s89
    %p101 = scmp.eq.s32.totalorder %s16, 1
    %p102 = por %p100, %p101
    %p104 = scmp.ne.s32.totalorder %s89, %s103
    %p105 = scmp.eq.s32.totalorder %s16, 0
    %p106 = por %p104, %p105
    %s107 = ssub.s32 %s10, %s17
    %p108 = scmp.eq.s32.totalorder %s107, 0
    %s110 = sadd.s32 %s109, 1
    %s111 = scalar_select %p108, %s109, %s110
    %p114 = pneg %p108
    %p115 = scmp.eq.s32.totalorder %s10, 1
    %p116 = por %p114, %p115
    %p117 = scmp.ne.s32.totalorder %s109, %s112
    %p118 = scmp.eq.s32.totalorder %s10, 0
    %p119 = por %p117, %p118
    %p120 = scmp.ne.s32.totalorder %s109, %s112
    %p121 = scmp.eq.s32.totalorder %s15, 1
    %p122 = por %p120, %p121
    %p123 = scmp.ne.s32.totalorder %s112, %s113
    %p124 = scmp.eq.s32.totalorder %s15, 0
    %p125 = por %p123, %p124
    %p126 = scmp.ne.s32.totalorder %s112, %s113
    %p127 = scmp.eq.s32.totalorder %s16, 1
    %p128 = por %p126, %p127
    %p130 = scmp.ne.s32.totalorder %s113, %s129
    %p131 = scmp.eq.s32.totalorder %s16, 0
    %p132 = por %p130, %p131
    %p133 = scmp.le.s32.totalorder 1, %s10
    %p134 = scmp.lt.s32.totalorder %s10, 3
    %p135 = pnand %p133, %p134
    %p136 = pneg %p135
    // Predicated region
    $region9: #{withbias_layernorm.1} parent=5 // pred_check
      _
    $region10: #{withbias_layernorm.1} parent=5 // pred_check_branch
      %138 = sbr.rel (%p135) target = $region12
    $region11: #{withbias_layernorm.1} parent=5 // pred_region
      %s139 = ssub.s32 %s10, 1
      // Predicated region
      $region13: #{withbias_layernorm.1} parent=11 // pred_check
        %p140 = pneg %p57
      $region14: #{withbias_layernorm.1} parent=11 // pred_check_branch
        %142 = sbr.rel (%p140) target = $region16
      $region15: #{withbias_layernorm.1} parent=11 // pred_region
        _
      $region16: #{withbias_layernorm.1} parent=11 // pred_fallthru
        _
      // Predicated region
      $region17: #{withbias_layernorm.1} parent=11 // pred_check
        %p143 = pneg %p78
      $region18: #{withbias_layernorm.1} parent=11 // pred_check_branch
        %145 = sbr.rel (%p143) target = $region20
      $region19: #{withbias_layernorm.1} parent=11 // pred_region
        _
      $region20: #{withbias_layernorm.1} parent=11 // pred_fallthru
        _
      // Predicated region
      $region21: #{withbias_layernorm.1} parent=11 // pred_check
        %p146 = pneg %p99
      $region22: #{withbias_layernorm.1} parent=11 // pred_check_branch
        %148 = sbr.rel (%p146) target = $region24
      $region23: #{withbias_layernorm.1} parent=11 // pred_region
        _
      $region24: #{withbias_layernorm.1} parent=11 // pred_fallthru
        _
    $region12: #{withbias_layernorm.1} parent=5 // pred_fallthru
      _
    %p149 = scmp.lt.s32.totalorder %s10, 2
    // Predicated region
    $region25: #{withbias_layernorm.1} parent=5 // pred_check
      %p150 = pneg %p149
    $region26: #{withbias_layernorm.1} parent=5 // pred_check_branch
      %152 = sbr.rel (%p150) target = $region28
    $region27: #{withbias_layernorm.1} parent=5 // pred_region
      // Predicated region
      $region29: #{withbias_layernorm.1} parent=27 // pred_check
        %p153 = pneg %p30
      $region30: #{withbias_layernorm.1} parent=27 // pred_check_branch
        %155 = sbr.rel (%p153) target = $region32
      $region31: #{withbias_layernorm.1} parent=27 // pred_region
        %s156 = smul.u32 2, %s10
        %p157 = scmp.lt.s32.totalorder %s156, 3
        %s158 = scalar_select %p157, %s156, 3
        %s159 = smul.addr %s158, 8
        %s160 = scalar_lea.vmem %s0, %s159
        %s161 = smul.u32 2, %s10
      $region32: #{withbias_layernorm.1} parent=27 // pred_fallthru
        _
    $region28: #{withbias_layernorm.1} parent=5 // pred_fallthru
      _
    %p162 = scmp.le.s32.totalorder 1, %s10
    %p163 = scmp.lt.s32.totalorder %s10, 3
    %p164 = pnand %p162, %p163
    %p165 = pneg %p164
    // Predicated region
    $region33: #{withbias_layernorm.1} parent=5 // pred_check
      _
    $region34: #{withbias_layernorm.1} parent=5 // pred_check_branch
      %167 = sbr.rel (%p164) target = $region36
    $region35: #{withbias_layernorm.1} parent=5 // pred_region
      %s168 = ssub.s32 %s10, 1
      %s169 = smul.u32 2, %s15
      %p170 = scmp.lt.s32.totalorder %s169, 3
      %s171 = scalar_select %p170, %s169, 3
      %s172 = smul.addr %s171, 8
      %s173 = scalar_lea.vmem %s0, %s172
      %p174 = pneg %p36
      %p175 = pneg %p33
      %p176 = pneg %p57
      %p177 = pneg %p54
      %p178 = pneg %p78
      %p179 = pneg %p75
      %p180 = pneg %p99
      %p181 = pneg %p96
      %p182 = pneg %p125
      %p183 = pneg %p122
      %s184 = smul.u32 2, %s15
      %p185 = scmp.lt.s32.totalorder %s184, 3
      %s186 = scalar_select %p185, %s184, 3
      %s187 = smul.addr %s186, 8
      %s188 = scalar_lea.vmem %s4, %s187
      %s189 = smul.u32 2, %s15
      %p190 = scmp.lt.s32.totalorder %s189, 3
      %s191 = scalar_select %p190, %s189, 3
      %s192 = smul.addr %s191, 8
      %s193 = scalar_lea.vmem %s0, %s192
      %s194 = smul.u32 2, %s15
      %s195 = smul.u32 2, %s15
      %p196 = scmp.lt.s32.totalorder %s195, 3
      %s197 = scalar_select %p196, %s195, 3
      %s198 = smul.addr %s197, 8
      %s199 = scalar_lea.vmem %s4, %s198
      %s200 = smul.u32 2, %s15
      %v201 = vld [vmem:[%s193] sm:$0xff]
      %v202 = vld [vmem:[%s193 + $0x8] sm:$0xff]
      %v203 = vld [vmem:[%s3] sm:$0xf]
      %v204 = vld [vmem:[%s3 + $0x4] sm:$0xf]
      %v205 = vld [vmem:[%s3 + $0x8] sm:$0xf]
      %v206 = vld [vmem:[%s3 + $0xc] sm:$0xf]
      %v207 = vld [vmem:[%s3 + $0x10] sm:$0xf]
      %v208 = vld [vmem:[%s3 + $0x14] sm:$0xf]
      %v209 = vld [vmem:[%s3 + $0x18] sm:$0xf]
      %v210 = vld [vmem:[%s3 + $0x1c] sm:$0xf]
      %v211 = vld [vmem:[%s3 + $0x20] sm:$0xf]
      %v212 = vld [vmem:[%s3 + $0x24] sm:$0xf]
      %v213 = vld [vmem:[%s3 + $0x28] sm:$0xf]
      %v214 = vld [vmem:[%s3 + $0x2c] sm:$0xf]
      %v215 = vld [vmem:[%s3 + $0x30] sm:$0xf]
      %v216 = vld [vmem:[%s3 + $0x34] sm:$0xf]
      %v217 = vld [vmem:[%s3 + $0x38] sm:$0xf]
      %v218 = vld [vmem:[%s3 + $0x3c] sm:$0xf]
      %v219 = vpack.c.bf16 %v201, %v201
      %v220 = vpack.c.bf16 %v202, %v202
      %v221 = vunpack.c.l.bf16 %v219
      %v222 = vunpack.c.l.bf16 %v220
      %v223 = vsub.f32 %v201, %v221
      %v224 = vsub.f32 %v202, %v222
      %v225 = vpack.c.bf16 %v224, %v223
      %v242 = vunpack.c.l.b16 %v203
      %v243 = vunpack.c.l.b16 %v204
      %v244 = vunpack.c.l.b16 %v205
      %v245 = vunpack.c.l.b16 %v206
      %v246 = vunpack.c.l.b16 %v207
      %v247 = vunpack.c.l.b16 %v208
      %v248 = vunpack.c.l.b16 %v209
      %v249 = vunpack.c.l.b16 %v210
      %v250 = vunpack.c.l.b16 %v211
      %v251 = vunpack.c.l.b16 %v212
      %v252 = vunpack.c.l.b16 %v213
      %v253 = vunpack.c.l.b16 %v214
      %v254 = vunpack.c.l.b16 %v215
      %v255 = vunpack.c.l.b16 %v216
      %v256 = vunpack.c.l.b16 %v217
      %v257 = vunpack.c.l.b16 %v218
      %v258 = vpack.c.b16 %v243, %v242
      %v259 = vpack.c.b16 %v245, %v244
      %v260 = vpack.c.b16 %v247, %v246
      %v261 = vpack.c.b16 %v249, %v248
      %v262 = vpack.c.b16 %v251, %v250
      %v263 = vpack.c.b16 %v253, %v252
      %v264 = vpack.c.b16 %v255, %v254
      %v265 = vpack.c.b16 %v257, %v256
      %274 = vmatpush.bf16.msra.mxu0 %v265
      %275 = vmatpush.bf16.msra.mxu0 %v264
      %276 = vmatpush.bf16.msra.mxu0 %v263
      %277 = vmatpush.bf16.msra.mxu0 %v262
      %278 = vmatpush.bf16.msra.mxu0 %v261
      %279 = vmatpush.bf16.msra.mxu0 %v260
      %280 = vmatpush.bf16.msra.mxu0 %v259
      %281 = vmatpush.bf16.msra.mxu0 %v258
      %282 = vmatmul.bf16.gmra.mxu0 %v225
      %v283 = vpop.f32.mrf.mxu0
      %v284 = vadd.f32 0.0, %v283
      %v285 = vpop.f32.mrf.mxu0
      %v286 = vadd.f32 0.0, %v285
      %287 = vdwg.mxu0
      %v290 = vunpack.c.l.b16 %v219
      %v291 = vunpack.c.l.b16 %v220
      %v292 = vpack.c.b16 %v291, %v290
      %294 = vmatpush.bf16.msra.mxu0 %v265
      %295 = vmatpush.bf16.msra.mxu0 %v264
      %296 = vmatpush.bf16.msra.mxu0 %v263
      %297 = vmatpush.bf16.msra.mxu0 %v262
      %298 = vmatpush.bf16.msra.mxu0 %v261
      %299 = vmatpush.bf16.msra.mxu0 %v260
      %300 = vmatpush.bf16.msra.mxu0 %v259
      %301 = vmatpush.bf16.msra.mxu0 %v258
      %302 = vmatmul.bf16.gmra.mxu0 %v292
      %v303 = vpop.f32.mrf.mxu0
      %v304 = vadd.f32 %v284, %v303
      %v305 = vpop.f32.mrf.mxu0
      %v306 = vadd.f32 %v286, %v305
      %307 = vdwg.mxu0
      %v308 = vsub.f32 %v201, %v304
      %v309 = vsub.f32 %v202, %v306
      %v310 = vmul.f32 %v308, %v308
      %v311 = vmul.f32 %v309, %v309
      %v312 = vpack.c.bf16 %v310, %v310
      %v313 = vpack.c.bf16 %v311, %v311
      %v314 = vunpack.c.l.bf16 %v312
      %v315 = vunpack.c.l.bf16 %v313
      %v316 = vsub.f32 %v310, %v314
      %v317 = vsub.f32 %v311, %v315
      %v318 = vpack.c.bf16 %v317, %v316
      %319 = vmatpush.bf16.msra.mxu0 %v265
      %320 = vmatpush.bf16.msra.mxu0 %v264
      %321 = vmatpush.bf16.msra.mxu0 %v263
      %322 = vmatpush.bf16.msra.mxu0 %v262
      %323 = vmatpush.bf16.msra.mxu0 %v261
      %324 = vmatpush.bf16.msra.mxu0 %v260
      %325 = vmatpush.bf16.msra.mxu0 %v259
      %326 = vmatpush.bf16.msra.mxu0 %v258
      %327 = vmatmul.bf16.gmra.mxu0 %v318
      %v328 = vpop.f32.mrf.mxu0
      %v329 = vadd.f32 0.0, %v328
      %v330 = vpop.f32.mrf.mxu0
      %v331 = vadd.f32 0.0, %v330
      %332 = vdwg.mxu0
      %v335 = vunpack.c.l.b16 %v312
      %v336 = vunpack.c.l.b16 %v313
      %v337 = vpack.c.b16 %v336, %v335
      %339 = vmatpush.bf16.msra.mxu0 %v265
      %340 = vmatpush.bf16.msra.mxu0 %v264
      %341 = vmatpush.bf16.msra.mxu0 %v263
      %342 = vmatpush.bf16.msra.mxu0 %v262
      %343 = vmatpush.bf16.msra.mxu0 %v261
      %344 = vmatpush.bf16.msra.mxu0 %v260
      %345 = vmatpush.bf16.msra.mxu0 %v259
      %346 = vmatpush.bf16.msra.mxu0 %v258
      %347 = vmatmul.bf16.gmra.mxu0 %v337
      %v348 = vpop.f32.mrf.mxu0
      %v349 = vadd.f32 %v329, %v348
      %v350 = vpop.f32.mrf.mxu0
      %v351 = vadd.f32 %v331, %v350
      %352 = vdwg.mxu0
      %v353 = vadd.f32 %v349, 1e-05
      %v354 = vadd.f32 %v351, 1e-05
      %v355 = vrsqrt.pop %v353
      %v356 = vmul.f32 %v355, %v353
      %v357 = vmul.f32 %v356, %v355
      %v358 = vmul.f32 0.5, %v357
      %v359 = vsub.f32 1.5, %v358
      %v360 = vmul.f32 %v355, %v359
      %vm361 = vweird.f32 %v353
      %vm362 = vweird.f32 %v355
      %vm363 = vmor %vm361, %vm362
      %v364 = vsel %vm363, %v355, %v360
      %v365 = vrsqrt.pop %v354
      %v366 = vmul.f32 %v365, %v354
      %v367 = vmul.f32 %v366, %v365
      %v368 = vmul.f32 0.5, %v367
      %v369 = vsub.f32 1.5, %v368
      %v370 = vmul.f32 %v365, %v369
      %vm371 = vweird.f32 %v354
      %vm372 = vweird.f32 %v365
      %vm373 = vmor %vm371, %vm372
      %v374 = vsel %vm373, %v365, %v370
      %v375 = vld [vmem:[%s1] sm:$0x1]
      %v376 = vld [vmem:[%s2] sm:$0x1]
      %v377 = vmul.f32 %v308, %v364
      %v378 = vmul.f32 %v309, %v374
      %v380 = vperm.slane %v375, 0
      %v382 = vmul.f32 %v377, %v380
      %v383 = vmul.f32 %v378, %v380
      %v385 = vperm.slane %v376, 0
      %v387 = vadd.f32 %v382, %v385
      %v388 = vadd.f32 %v383, %v385
      %389 = vst [vmem:[%s199] sm:$0xff] %v387
      %390 = vst [vmem:[%s199 + $0x8] sm:$0xff] %v388
      %s391 = smul.u32 2, %s15
      %p392 = scmp.lt.s32.totalorder %s391, 3
      %s393 = scalar_select %p392, %s391, 3
      %s394 = smul.addr %s393, 8
      %s395 = scalar_lea.vmem %s4, %s394
      // Predicated region
      $region37: #{withbias_layernorm.1} parent=35 // pred_check
        %p396 = pneg %p122
      $region38: #{withbias_layernorm.1} parent=35 // pred_check_branch
        %398 = sbr.rel (%p396) target = $region40
      $region39: #{withbias_layernorm.1} parent=35 // pred_region
        %s399 = smul.u32 2, %s15
      $region40: #{withbias_layernorm.1} parent=35 // pred_fallthru
        _
    $region36: #{withbias_layernorm.1} parent=5 // pred_fallthru
      _
    %p400 = scmp.le.s32.totalorder 2, %s10
    // Predicated region
    $region41: #{withbias_layernorm.1} parent=5 // pred_check
      %p401 = pneg %p400
    $region42: #{withbias_layernorm.1} parent=5 // pred_check_branch
      %403 = sbr.rel (%p401) target = $region44
    $region43: #{withbias_layernorm.1} parent=5 // pred_region
      %s404 = ssub.s32 %s10, 2
      // Predicated region
      $region45: #{withbias_layernorm.1} parent=43 // pred_check
        %p405 = pneg %p128
      $region46: #{withbias_layernorm.1} parent=43 // pred_check_branch
        %407 = sbr.rel (%p405) target = $region48
      $region47: #{withbias_layernorm.1} parent=43 // pred_region
        %s408 = smul.u32 2, %s16
        %p409 = scmp.lt.s32.totalorder %s408, 3
        %s410 = scalar_select %p409, %s408, 3
        %s411 = smul.addr %s410, 8
        %s412 = scalar_lea.vmem %s4, %s411
      $region48: #{withbias_layernorm.1} parent=43 // pred_fallthru
        _
    $region44: #{withbias_layernorm.1} parent=5 // pred_fallthru
      _
  $region6: #{withbias_layernorm.1} parent=0 // loop_footer
    %s14 = sadd.s32 1, %s10
  $region7: #{withbias_layernorm.1} parent=0 // loop_footer_branch
    %9 = sbr.rel target = $region3
  $region8: #{withbias_layernorm.1} parent=0 // loop_exit
    _

</llo_original>
